<compile_context>
chip_gen: v5e
topology: v5e:2x2
jax: 0.10.0
libtpu: 0.0.40
codegen_flags: <defaults>
</compile_context>

<pallas_src>
import numpy as np

import jax
import jax.numpy as jnp
from jax.experimental import pallas as pl
from jax.experimental.pallas import tpu as pltpu


def _round_up(x, m):
    return ((x + m - 1) // m) * m


def _cdiv(a, b):
    return (a + b - 1) // b


def _vmem_capacity_bytes():
    try:
        info = pltpu.get_tpu_info()
        cap = getattr(info, "vmem_capacity_bytes", None)
        if cap:
            return int(cap)
    except Exception:
        pass
    return 128 * 1024 * 1024  # v5e/v6e default; v7x resolves via get_tpu_info


def _pick_divisor_tile(total, target, unit=128):
    """Largest multiple of `unit` that divides `total` and is <= max(target, unit)."""
    k = total // unit
    best = 1
    for d in range(1, k + 1):
        if k % d == 0 and d * unit <= max(target, unit):
            best = d
    return best * unit


# ---------------------------------------------------------------------------
# Kernels
# ---------------------------------------------------------------------------

def _ffn_kernel_resident(x_ref, w1_ref, w2_ref, b2_ref, o_ref):
    # Whole FFN for one row tile. W1/W2 block indices never change across the grid,
    # so Pallas streams them from HBM exactly once.
    x = x_ref[...].astype(w1_ref.dtype)  # in-kernel cast: VPU filler under the MXU
    h = jnp.dot(x, w1_ref[...], preferred_element_type=jnp.float32)
    y = jnp.dot(h.astype(w2_ref.dtype), w2_ref[...],
                preferred_element_type=jnp.float32)
    y = y + b2_ref[...]                  # b1 already folded into b2 (wrapper)
    o_ref[...] = jnp.maximum(y, 0.0).astype(o_ref.dtype)


def _ffn_kernel_ftiled(x_ref, w1_ref, w2_ref, b2_ref, o_ref, acc_ref):
    # F-tiled path: accumulate dense2 partials across F tiles in an f32 scratch.
    f = pl.program_id(1)

    @pl.when(f == 0)
    def _():
        acc_ref[...] = jnp.zeros_like(acc_ref)

    x = x_ref[...].astype(w1_ref.dtype)
    h = jnp.dot(x, w1_ref[...], preferred_element_type=jnp.float32)
    acc_ref[...] += jnp.dot(h.astype(w2_ref.dtype), w2_ref[...],
                            preferred_element_type=jnp.float32)

    @pl.when(f == pl.num_programs(1) - 1)
    def _():
        y = acc_ref[...] + b2_ref[...]
        o_ref[...] = jnp.maximum(y, 0.0).astype(o_ref.dtype)


# ---------------------------------------------------------------------------
# Wrapper
# ---------------------------------------------------------------------------

def position_wise_ffn(
    x, w1, b1, w2, b2,
    *,
    tm=768,                       # row tile (sweepable); auto-shrunk to fit VMEM
    tf=512,                       # FFN-width tile target for the F-tiled path
    compute_dtype=jnp.bfloat16,   # MXU input dtype; accumulation stays f32
    out_dtype=None,               # defaults to x.dtype; pass bf16 to halve writeback
    vmem_limit_bytes=None,        # None = ~75% of physical per-core VMEM
    resident=None,                # None = auto (fit-to-VMEM); True/False = force
):
    """x: (..., hidden_dim) -> (..., pw_num_outputs). Weights stored as (in, out)."""
    lead_shape = x.shape[:-1]
    H = x.shape[-1]
    F = w1.shape[1]
    O = w2.shape[1]
    if out_dtype is None:
        out_dtype = x.dtype

    x2d = x.reshape(-1, H)
    M = x2d.shape[0]

    x_item = np.dtype(x.dtype).itemsize
    c_item = np.dtype(compute_dtype).itemsize
    o_item = np.dtype(out_dtype).itemsize

    # Lane-dense (128) padding on feature dims.
    H_pad = _round_up(H, 128)
    F_pad = _round_up(F, 128)
    O_pad = _round_up(O, 128)

    # Row tile: >= 16 sublanes whenever a 16-bit dtype is in play (bf16 packing).
    row_align = 8 if (x_item == 4 and c_item == 4 and o_item == 4) else 16
    tm_eff = max(row_align, min(tm, _round_up(M, row_align)))
    # Give megacore (v7x: 2 TensorCores) at least 2 row tiles on real workloads.
    if M >= 256 and _cdiv(M, tm_eff) < 2:
        tm_eff = _round_up(_cdiv(M, 2), row_align)

    # VMEM scoped budget.
    if vmem_limit_bytes is None:
        vmem_limit_bytes = int(_vmem_capacity_bytes() * 0.75)
    budget = vmem_limit_bytes

    def vmem_usage(tm_e, tf_e, with_acc):
        u = 2 * tm_e * H_pad * x_item          # x row tile (double-buffered)
        u += 2 * H_pad * tf_e * c_item         # W1 slab
        u += 2 * tf_e * O_pad * c_item         # W2 slab
        u += 2 * 8 * O_pad * 4                 # b2 (f32, sublane-padded)
        u += 2 * tm_e * O_pad * o_item         # out tile
        if with_acc:
            u += tm_e * O_pad * 4              # f32 accumulator scratch
        return u

    # Weights-resident fast path: collapse the F axis so W1/W2 are DMA'd once and
    # the accumulator RMW / per-F-step grid overhead disappears.
    if resident is None:
        resident = vmem_usage(tm_eff, F_pad, with_acc=False) <= budget
    if resident:
        tf_eff = F_pad
    else:
        tf_eff = _pick_divisor_tile(F_pad, tf)  # divides F_pad: no padded MXU/DMA work
        while vmem_usage(tm_eff, tf_eff, True) > budget and tm_eff > row_align:
            tm_eff = max(row_align, _round_up(tm_eff // 2, row_align))
        if vmem_usage(tm_eff, tf_eff, True) > budget:
            tf_eff = 128
        # TODO(synk): extremely wide hidden dims (H_pad) can still exceed VMEM; add an
        # H (K) grid axis with a second accumulation stage if that case shows up.

    M_pad = _round_up(M, tm_eff)
    n_row_tiles = M_pad // tm_eff

    # x kept in its original dtype (cast in-kernel); pad only when actually needed.
    x_p = x2d
    if M_pad != M or H_pad != H:
        x_p = jnp.pad(x_p, ((0, M_pad - M), (0, H_pad - H)))

    w1_p = w1.astype(compute_dtype)
    if H_pad != H or F_pad != F:
        w1_p = jnp.pad(w1_p, ((0, H_pad - H), (0, F_pad - F)))
    w2_p = w2.astype(compute_dtype)
    if F_pad != F or O_pad != O:
        w2_p = jnp.pad(w2_p, ((0, F_pad - F), (0, O_pad - O)))

    # Fold dense1's bias into dense2's bias (valid: no nonlinearity between the dots).
    b2_eff = (b2.astype(jnp.float32)
              + b1.astype(jnp.float32) @ w2.astype(jnp.float32)).reshape(1, O)
    if O_pad != O:
        b2_eff = jnp.pad(b2_eff, ((0, 0), (0, O_pad - O)))

    cost = pl.CostEstimate(
        flops=2 * M * (H * F + F * O),
        transcendentals=0,
        bytes_accessed=(M * H * x_item + H * F * c_item + F * O * c_item
                        + O * 4 + M * O * o_item),
    )

    if resident:
        out = pl.pallas_call(
            _ffn_kernel_resident,
            out_shape=jax.ShapeDtypeStruct((M_pad, O_pad), out_dtype),
            grid_spec=pltpu.PrefetchScalarGridSpec(
                num_scalar_prefetch=0,
                grid=(n_row_tiles,),
                in_specs=[
                    pl.BlockSpec((tm_eff, H_pad), lambda i: (i, 0)),   # x row tile
                    pl.BlockSpec((H_pad, F_pad), lambda i: (0, 0)),    # W1 (resident)
                    pl.BlockSpec((F_pad, O_pad), lambda i: (0, 0)),    # W2 (resident)
                    pl.BlockSpec((1, O_pad), lambda i: (0, 0)),        # b2_eff (f32)
                ],
                out_specs=pl.BlockSpec((tm_eff, O_pad), lambda i: (i, 0)),
            ),
            compiler_params=pltpu.CompilerParams(
                dimension_semantics=("parallel",),
                vmem_limit_bytes=vmem_limit_bytes,
            ),
            cost_estimate=cost,
        )(x_p, w1_p, w2_p, b2_eff)
    else:
        out = pl.pallas_call(
            _ffn_kernel_ftiled,
            out_shape=jax.ShapeDtypeStruct((M_pad, O_pad), out_dtype),
            grid_spec=pltpu.PrefetchScalarGridSpec(
                num_scalar_prefetch=0,
                grid=(n_row_tiles, F_pad // tf_eff),
                in_specs=[
                    pl.BlockSpec((tm_eff, H_pad), lambda i, f: (i, 0)),  # x row tile
                    pl.BlockSpec((H_pad, tf_eff), lambda i, f: (0, f)),  # W1 F-slab
                    pl.BlockSpec((tf_eff, O_pad), lambda i, f: (f, 0)),  # W2 F-slab
                    pl.BlockSpec((1, O_pad), lambda i, f: (0, 0)),       # b2_eff (f32)
                ],
                out_specs=pl.BlockSpec((tm_eff, O_pad), lambda i, f: (i, 0)),
                scratch_shapes=[pltpu.VMEM((tm_eff, O_pad), jnp.float32)],
            ),
            compiler_params=pltpu.CompilerParams(
                dimension_semantics=("parallel", "arbitrary"),
                vmem_limit_bytes=vmem_limit_bytes,
            ),
            cost_estimate=cost,
        )(x_p, w1_p, w2_p, b2_eff)

    if M_pad != M or O_pad != O:
        out = out[:M, :O]
    return out.reshape(*lead_shape, O)


if __name__ == "__main__":
    # Small shapes consistent with the module: batch=2, seq=8, hidden=32,
    # ffn_num_hiddens=64, pw_num_outputs=32.
    batch, seq, hidden_dim = 2, 8, 32
    ffn_num_hiddens, pw_num_outputs = 64, 32

    key = jax.random.PRNGKey(0)
    kx, kw1, kb1, kw2, kb2 = jax.random.split(key, 5)

    x = jax.random.normal(kx, (batch, seq, hidden_dim), dtype=jnp.float32)
    # torch.nn.Linear stores (out, in); we keep the transposed (in, out) layout.
    w1 = jax.random.normal(kw1, (hidden_dim, ffn_num_hiddens), jnp.float32) * 0.1
    b1 = jax.random.normal(kb1, (ffn_num_hiddens,), jnp.float32) * 0.1
    w2 = jax.random.normal(kw2, (ffn_num_hiddens, pw_num_outputs), jnp.float32) * 0.1
    b2 = jax.random.normal(kb2, (pw_num_outputs,), jnp.float32) * 0.1

    # Pure-JAX reference (f32): relu(dense2(dense1(x))).
    ref = jnp.maximum((x @ w1 + b1) @ w2 + b2, 0.0)

    # 1) Exactness path (weights-resident, f32 compute).
    out_f32 = position_wise_ffn(x, w1, b1, w2, b2, compute_dtype=jnp.float32)
    jax.block_until_ready(out_f32)
    assert out_f32.shape == (batch, seq, pw_num_outputs)
    assert jnp.allclose(out_f32, ref, atol=1e-5, rtol=1e-5)

    # 2) Performance path (weights-resident, bf16 MXU inputs, f32 accumulation).
    out_bf16 = position_wise_ffn(x, w1, b1, w2, b2)
    jax.block_until_ready(out_bf16)
    assert out_bf16.shape == (batch, seq, pw_num_outputs)
    assert jnp.allclose(out_bf16, ref, atol=3e-2, rtol=3e-2)

    # 3) F-tiled accumulator path, forced (exercises the pl.when init/finalize code).
    F2 = 256
    kw1b, kw2b = jax.random.split(kw1, 2)
    w1b = jax.random.normal(kw1b, (hidden_dim, F2), jnp.float32) * 0.1
    b1b = jax.random.normal(kb1, (F2,), jnp.float32) * 0.1
    w2b = jax.random.normal(kw2b, (F2, pw_num_outputs), jnp.float32) * 0.1
    ref2 = jnp.maximum((x @ w1b + b1b) @ w2b + b2, 0.0)
    out_tiled = position_wise_ffn(
        x, w1b, b1b, w2b, b2, tf=128, resident=False, compute_dtype=jnp.float32)
    jax.block_until_ready(out_tiled)
    assert out_tiled.shape == (batch, seq, pw_num_outputs)
    assert jnp.allclose(out_tiled, ref2, atol=1e-5, rtol=1e-5)

    print("KERNEL_OK")
</pallas_src>

<mosaic_0001>
module attributes {stable_mosaic.version = 11 : i64} {
  func.func @_ffn_kernel_resident(%arg0: i32, %arg1: memref<16x128xf32, #tpu.memory_space<vmem>>, %arg2: memref<128x128xf32, #tpu.memory_space<vmem>>, %arg3: memref<128x128xf32, #tpu.memory_space<vmem>>, %arg4: memref<1x128xf32, #tpu.memory_space<vmem>>, %arg5: memref<16x128xf32, #tpu.memory_space<vmem>>) attributes {dimension_semantics = [#tpu.dimension_semantics<parallel>], iteration_bounds = array<i64: 1>, scalar_prefetch = 0 : i64, scratch_operands = 0 : i64, tpu.core_type = #tpu.core_type<tc>, window_params = [{transform_indices = @transform_0, window_bounds = array<i64: 16, 128>}, {pipeline_mode = #tpu.pipeline_mode<synchronous>, transform_indices = @transform_1, window_bounds = array<i64: 128, 128>}, {pipeline_mode = #tpu.pipeline_mode<synchronous>, transform_indices = @transform_2, window_bounds = array<i64: 128, 128>}, {pipeline_mode = #tpu.pipeline_mode<synchronous>, transform_indices = @transform_3, window_bounds = array<i64: 1, 128>}, {transform_indices = @transform_4, window_bounds = array<i64: 16, 128>}]} {
    %c0 = arith.constant 0 : index
    %c0_0 = arith.constant 0 : index
    %0 = vector.load %arg1[%c0, %c0_0] : memref<16x128xf32, #tpu.memory_space<vmem>>, vector<16x128xf32>
    %c0_1 = arith.constant 0 : index
    %c0_2 = arith.constant 0 : index
    %1 = vector.load %arg2[%c0_1, %c0_2] : memref<128x128xf32, #tpu.memory_space<vmem>>, vector<128x128xf32>
    %cst = arith.constant dense<0.000000e+00> : vector<16x128xf32>
    %2 = tpu.matmul %0, %1, %cst {dimension_numbers = #tpu.dot_dimension_numbers<[1], [0], [0], [1], [0, 0, 1, 1], [], []>} : vector<16x128xf32>, vector<128x128xf32>, vector<16x128xf32> -> vector<16x128xf32>
    %c0_3 = arith.constant 0 : index
    %c0_4 = arith.constant 0 : index
    %3 = vector.load %arg3[%c0_3, %c0_4] : memref<128x128xf32, #tpu.memory_space<vmem>>, vector<128x128xf32>
    %cst_5 = arith.constant dense<0.000000e+00> : vector<16x128xf32>
    %4 = tpu.matmul %2, %3, %cst_5 {dimension_numbers = #tpu.dot_dimension_numbers<[1], [0], [0], [1], [0, 0, 1, 1], [], []>} : vector<16x128xf32>, vector<128x128xf32>, vector<16x128xf32> -> vector<16x128xf32>
    %c0_6 = arith.constant 0 : index
    %c0_7 = arith.constant 0 : index
    %5 = vector.load %arg4[%c0_6, %c0_7] : memref<1x128xf32, #tpu.memory_space<vmem>>, vector<1x128xf32>
    %6 = vector.broadcast %5 : vector<1x128xf32> to vector<16x128xf32>
    %7 = arith.addf %4, %6 : vector<16x128xf32>
    %cst_8 = arith.constant 0.000000e+00 : f32
    %8 = vector.broadcast %cst_8 : f32 to vector<16x128xf32>
    %9 = arith.maximumf %7, %8 : vector<16x128xf32>
    %c0_9 = arith.constant 0 : index
    %c0_10 = arith.constant 0 : index
    %10 = vector.load %arg5[%c0_9, %c0_10] : memref<16x128xf32, #tpu.memory_space<vmem>>, vector<16x128xf32>
    tpu.vector_store %arg5[%c0_9, %c0_10], %9 {strides = array<i32>} : memref<16x128xf32, #tpu.memory_space<vmem>>, vector<16x128xf32>,
    return
  }
  func.func @transform_0(%arg0: i32) -> (i32, i32) {
    %c0_i32 = arith.constant 0 : i32
    %c0_i32_0 = arith.constant 0 : i32
    return %arg0, %c0_i32 : i32, i32
  }
  func.func @transform_1(%arg0: i32) -> (i32, i32) {
    %c0_i32 = arith.constant 0 : i32
    %c0_i32_0 = arith.constant 0 : i32
    %c0_i32_1 = arith.constant 0 : i32
    return %c0_i32, %c0_i32_0 : i32, i32
  }
  func.func @transform_2(%arg0: i32) -> (i32, i32) {
    %c0_i32 = arith.constant 0 : i32
    %c0_i32_0 = arith.constant 0 : i32
    %c0_i32_1 = arith.constant 0 : i32
    return %c0_i32, %c0_i32_0 : i32, i32
  }
  func.func @transform_3(%arg0: i32) -> (i32, i32) {
    %c0_i32 = arith.constant 0 : i32
    %c0_i32_0 = arith.constant 0 : i32
    %c0_i32_1 = arith.constant 0 : i32
    return %c0_i32, %c0_i32_0 : i32, i32
  }
  func.func @transform_4(%arg0: i32) -> (i32, i32) {
    %c0_i32 = arith.constant 0 : i32
    %c0_i32_0 = arith.constant 0 : i32
    return %arg0, %c0_i32 : i32, i32
  }
}

</mosaic_0001>

<llo_original>
// kernel: tpu_custom_call.1
$region0: #{tpu_custom_call.1}
  #allocation0 [shape = 'u32[]', space=smem, size = 0x4, offset = 0x4, fixed_abs, tag = 'smem constant byte address 0x4 - core index']
  #allocation1 [shape = 'u32[72,128]{1,0:T(1,128)}', space=vmem, size = 0x9000, scoped, tag = 'internal scratch']
  %s0 = inlined_call_operand.hbm [shape: f32[16,128], index: 0, kind: input, shape index: {}]
  %s1 = inlined_call_operand.hbm [shape: f32[128,128], index: 1, kind: input, shape index: {}]
  %s2 = inlined_call_operand.hbm [shape: f32[128,128], index: 2, kind: input, shape index: {}]
  %s3 = inlined_call_operand.vmem [shape: f32[1,128], index: 3, kind: input, shape index: {}]
  %s4 = inlined_call_operand.hbm [shape: f32[16,128], index: 4, kind: output, shape index: {}]
  %s5 = sld [smem:[#allocation0]]
  $region38: #{tpu_custom_call.1} parent=0
    _
  %s7 = ssub.s32 1, %s5
  %s8 = scalar_select 0, %s7, %s5
  $region1: #{tpu_custom_call.1} parent=0
    #allocation2 [shape = 'u8[8192]{0}', space=vmem, size = 0x2000, scoped, tag = 'input window, operand 0, single buffered']
    #allocation3 [shape = 's32[1]{0}', space=sflag, size = 0x4, scoped, tag = 'scoped memory for tpu_custom_call.1']
    #allocation4 [shape = 's32[1]{0}', space=sflag, size = 0x4, scoped, tag = 'scoped memory for tpu_custom_call.1']
    #allocation5 [shape = 'u8[65536]{0}', space=vmem, size = 0x10000, scoped, tag = 'input window, operand 1, single buffered']
    #allocation6 [shape = 's32[1]{0}', space=sflag, size = 0x4, scoped, tag = 'scoped memory for tpu_custom_call.1']
    #allocation7 [shape = 'u8[65536]{0}', space=vmem, size = 0x10000, scoped, tag = 'input window, operand 2, single buffered']
    #allocation8 [shape = 'u8[8192]{0}', space=vmem, size = 0x2000, scoped, tag = 'output window, operand 0, single buffered']
    %9 = vsyncpa [#allocation3], 0
    %10 = vsyncpa [#allocation6], 0
    %11 = vsyncpa [#allocation4], 0
    // Predicated region
    $region2: #{tpu_custom_call.1} parent=1 // pred_check
      _
    $region3: #{tpu_custom_call.1} parent=1 // pred_check_branch
      %13 = sbr.rel (0) target = $region5
    $region4: #{tpu_custom_call.1} parent=1 // pred_region
      %15 = vsyncadd [#allocation3], 0
      %s16 = sshll.u32 %s0, 4
      %s17 = int_to_ptr.hbm [resolvable:$true] %s16
      %s18 = sshll.u32 [#allocation2], 4
      %s19 = int_to_ptr.vmem [resolvable:$true] %s18
      %24 = dma.hbm_to_vmem [thread:$0]  %s17, 256, %s19, [#allocation3], 128, 128, 8
    $region5: #{tpu_custom_call.1} parent=1 // pred_fallthru
      _
    // Predicated region
    $region6: #{tpu_custom_call.1} parent=1 // pred_check
      _
    $region7: #{tpu_custom_call.1} parent=1 // pred_check_branch
      %26 = sbr.rel (0) target = $region9
    $region8: #{tpu_custom_call.1} parent=1 // pred_region
      %28 = vsyncadd [#allocation6], 0
      %s29 = sshll.u32 %s1, 4
      %s30 = int_to_ptr.hbm [resolvable:$true] %s29
      %s31 = sshll.u32 [#allocation5], 4
      %s32 = int_to_ptr.vmem [resolvable:$true] %s31
      %37 = dma.hbm_to_vmem [thread:$0]  %s30, 2048, %s32, [#allocation6], 128, 128, 8
    $region9: #{tpu_custom_call.1} parent=1 // pred_fallthru
      _
    // Predicated region
    $region10: #{tpu_custom_call.1} parent=1 // pred_check
      _
    $region11: #{tpu_custom_call.1} parent=1 // pred_check_branch
      %39 = sbr.rel (0) target = $region13
    $region12: #{tpu_custom_call.1} parent=1 // pred_region
      %41 = vsyncadd [#allocation6], 0
      %s42 = sshll.u32 %s2, 4
      %s43 = int_to_ptr.hbm [resolvable:$true] %s42
      %s44 = sshll.u32 [#allocation7], 4
      %s45 = int_to_ptr.vmem [resolvable:$true] %s44
      %50 = dma.hbm_to_vmem [thread:$0]  %s43, 2048, %s45, [#allocation6], 128, 128, 8
    $region13: #{tpu_custom_call.1} parent=1 // pred_fallthru
      _
    // Predicated region
    $region14: #{tpu_custom_call.1} parent=1 // pred_check
      _
    $region15: #{tpu_custom_call.1} parent=1 // pred_check_branch
      %52 = sbr.rel (0) target = $region17
    $region16: #{tpu_custom_call.1} parent=1 // pred_region
      _
    $region17: #{tpu_custom_call.1} parent=1 // pred_fallthru
      _
    // Predicated region
    $region18: #{tpu_custom_call.1} parent=1 // pred_check
      _
    $region19: #{tpu_custom_call.1} parent=1 // pred_check_branch
      %54 = sbr.rel (0) target = $region21
    $region20: #{tpu_custom_call.1} parent=1 // pred_region
      %56 = dma.done [#allocation3], 256
    $region21: #{tpu_custom_call.1} parent=1 // pred_fallthru
      _
    // Predicated region
    $region22: #{tpu_custom_call.1} parent=1 // pred_check
      _
    $region23: #{tpu_custom_call.1} parent=1 // pred_check_branch
      %58 = sbr.rel (0) target = $region25
    $region24: #{tpu_custom_call.1} parent=1 // pred_region
      %60 = dma.done [#allocation6], 2048
    $region25: #{tpu_custom_call.1} parent=1 // pred_fallthru
      _
    // Predicated region
    $region26: #{tpu_custom_call.1} parent=1 // pred_check
      _
    $region27: #{tpu_custom_call.1} parent=1 // pred_check_branch
      %62 = sbr.rel (0) target = $region29
    $region28: #{tpu_custom_call.1} parent=1 // pred_region
      %64 = dma.done [#allocation6], 2048
    $region29: #{tpu_custom_call.1} parent=1 // pred_fallthru
      _
    %v65 = vld [vmem:[#allocation2] sm:$0xff]
    %v66 = vld [vmem:[#allocation2 + $0x8] sm:$0xff]
    %v67 = vld [vmem:[#allocation5] sm:$0xff]
    %v68 = vld [vmem:[#allocation5 + $0x8] sm:$0xff]
    %v69 = vld [vmem:[#allocation5 + $0x10] sm:$0xff]
    %v70 = vld [vmem:[#allocation5 + $0x18] sm:$0xff]
    %v71 = vld [vmem:[#allocation5 + $0x20] sm:$0xff]
    %v72 = vld [vmem:[#allocation5 + $0x28] sm:$0xff]
    %v73 = vld [vmem:[#allocation5 + $0x30] sm:$0xff]
    %v74 = vld [vmem:[#allocation5 + $0x38] sm:$0xff]
    %v75 = vld [vmem:[#allocation5 + $0x40] sm:$0xff]
    %v76 = vld [vmem:[#allocation5 + $0x48] sm:$0xff]
    %v77 = vld [vmem:[#allocation5 + $0x50] sm:$0xff]
    %v78 = vld [vmem:[#allocation5 + $0x58] sm:$0xff]
    %v79 = vld [vmem:[#allocation5 + $0x60] sm:$0xff]
    %v80 = vld [vmem:[#allocation5 + $0x68] sm:$0xff]
    %v81 = vld [vmem:[#allocation5 + $0x70] sm:$0xff]
    %v82 = vld [vmem:[#allocation5 + $0x78] sm:$0xff]
    %83 = vmatpush.msra.mxu0 %v82
    %84 = vmatpush.msra.mxu0 %v81
    %85 = vmatpush.msra.mxu0 %v80
    %86 = vmatpush.msra.mxu0 %v79
    %87 = vmatpush.msra.mxu0 %v78
    %88 = vmatpush.msra.mxu0 %v77
    %89 = vmatpush.msra.mxu0 %v76
    %90 = vmatpush.msra.mxu0 %v75
    %91 = vmatpush.msra.mxu0 %v74
    %92 = vmatpush.msra.mxu0 %v73
    %93 = vmatpush.msra.mxu0 %v72
    %94 = vmatpush.msra.mxu0 %v71
    %95 = vmatpush.msra.mxu0 %v70
    %96 = vmatpush.msra.mxu0 %v69
    %97 = vmatpush.msra.mxu0 %v68
    %98 = vmatpush.msra.mxu0 %v67
    %99 = vmatmul.f32.gmra.mxu0 %v65
    %v100 = vpop.f32.mrf.mxu0
    %v101 = vadd.f32 0.0, %v100
    %102 = vmatmul.f32.gmra.mxu0 %v66
    %v103 = vpop.f32.mrf.mxu0
    %v104 = vadd.f32 0.0, %v103
    %105 = vdwg.mxu0
    %v106 = vld [vmem:[#allocation7] sm:$0xff]
    %v107 = vld [vmem:[#allocation7 + $0x8] sm:$0xff]
    %v108 = vld [vmem:[#allocation7 + $0x10] sm:$0xff]
    %v109 = vld [vmem:[#allocation7 + $0x18] sm:$0xff]
    %v110 = vld [vmem:[#allocation7 + $0x20] sm:$0xff]
    %v111 = vld [vmem:[#allocation7 + $0x28] sm:$0xff]
    %v112 = vld [vmem:[#allocation7 + $0x30] sm:$0xff]
    %v113 = vld [vmem:[#allocation7 + $0x38] sm:$0xff]
    %v114 = vld [vmem:[#allocation7 + $0x40] sm:$0xff]
    %v115 = vld [vmem:[#allocation7 + $0x48] sm:$0xff]
    %v116 = vld [vmem:[#allocation7 + $0x50] sm:$0xff]
    %v117 = vld [vmem:[#allocation7 + $0x58] sm:$0xff]
    %v118 = vld [vmem:[#allocation7 + $0x60] sm:$0xff]
    %v119 = vld [vmem:[#allocation7 + $0x68] sm:$0xff]
    %v120 = vld [vmem:[#allocation7 + $0x70] sm:$0xff]
    %v121 = vld [vmem:[#allocation7 + $0x78] sm:$0xff]
    %v122 = vld [vmem:[%s3] sm:$0x1]
    %v124 = vperm.slane %v122, 0
    %126 = vmatpush.msra.mxu0 %v121
    %127 = vmatpush.msra.mxu0 %v120
    %128 = vmatpush.msra.mxu0 %v119
    %129 = vmatpush.msra.mxu0 %v118
    %130 = vmatpush.msra.mxu0 %v117
    %131 = vmatpush.msra.mxu0 %v116
    %132 = vmatpush.msra.mxu0 %v115
    %133 = vmatpush.msra.mxu0 %v114
    %134 = vmatpush.msra.mxu0 %v113
    %135 = vmatpush.msra.mxu0 %v112
    %136 = vmatpush.msra.mxu0 %v111
    %137 = vmatpush.msra.mxu0 %v110
    %138 = vmatpush.msra.mxu0 %v109
    %139 = vmatpush.msra.mxu0 %v108
    %140 = vmatpush.msra.mxu0 %v107
    %141 = vmatpush.msra.mxu0 %v106
    %142 = vmatmul.f32.gmra.mxu0 %v101
    %v143 = vpop.f32.mrf.mxu0
    %v144 = vadd.f32 %v124, %v143
    %145 = vmatmul.f32.gmra.mxu0 %v104
    %v146 = vpop.f32.mrf.mxu0
    %v147 = vadd.f32 %v124, %v146
    %148 = vdwg.mxu0
    %v149 = vmax.f32 %v144, 0.0
    %v150 = vmax.f32 %v147, 0.0
    %151 = vst [vmem:[#allocation8] sm:$0xff] %v149
    %152 = vst [vmem:[#allocation8 + $0x8] sm:$0xff] %v150
    // Predicated region
    $region30: #{tpu_custom_call.1} parent=1 // pred_check
      _
    $region31: #{tpu_custom_call.1} parent=1 // pred_check_branch
      %154 = sbr.rel (0) target = $region33
    $region32: #{tpu_custom_call.1} parent=1 // pred_region
      %156 = vsyncadd [#allocation4], 0
      %s157 = sshll.u32 [#allocation8], 4
      %s158 = int_to_ptr.vmem [resolvable:$true] %s157
      %s159 = sshll.u32 %s4, 4
      %s160 = int_to_ptr.hbm [resolvable:$true] %s159
      %165 = dma.vmem_to_hbm [thread:$0]  %s158, 256, %s160, [#allocation4], 128, 128, 8
    $region33: #{tpu_custom_call.1} parent=1 // pred_fallthru
      _
    // Predicated region
    $region34: #{tpu_custom_call.1} parent=1 // pred_check
      _
    $region35: #{tpu_custom_call.1} parent=1 // pred_check_branch
      %167 = sbr.rel (0) target = $region37
    $region36: #{tpu_custom_call.1} parent=1 // pred_region
      %169 = dma.done [#allocation4], 256
    $region37: #{tpu_custom_call.1} parent=1 // pred_fallthru
      _
    %170 = vsyncpa [#allocation3], 1
    %171 = vsyncpa [#allocation6], 1
    %172 = vsyncpa [#allocation4], 1

</llo_original>
